<compile_context>
chip_gen: v7x
topology: tpu7x:2x2x1
jax: 0.10.0
libtpu: 0.0.40
codegen_flags: <defaults>
</compile_context>

<pallas_src>
import functools

import jax
import jax.numpy as jnp
from jax.experimental import pallas as pl
from jax.experimental.pallas import tpu as pltpu


def _round_up(x, m):
    return ((x + m - 1) // m) * m


def _sine_layer_kernel(x_ref, w_ref, b_ref, o_ref, *, omega_0):
    # MXU matmul with f32 accumulation; epilogue (bias, scale, sin) in f32.
    acc = jnp.dot(x_ref[...], w_ref[...], preferred_element_type=jnp.float32)
    acc = acc + b_ref[...].astype(jnp.float32)     # (1, out_f) broadcasts over rows
    o_ref[...] = jnp.sin(omega_0 * acc).astype(o_ref.dtype)


def sine_layer(x, w, b, omega_0=30.0, *, block_rows=1024,
               compute_dtype=jnp.float32):
    """SIREN sine layer: sin(omega_0 * (x @ w + b)).

    x: (N, in_features) f32
    w: (in_features, out_features) f32  (PyTorch weight, pre-transposed)
    b: (out_features,) f32
    compute_dtype: dtype of the matmul inputs (f32 or bf16); accumulation and
                   the epilogue are always f32.
    Returns (N, out_features) f32.
    """
    n, in_f = x.shape
    in_f2, out_f = w.shape
    assert in_f == in_f2
    assert b.shape == (out_f,)

    # --- lane-dense output: pad out_features to a multiple of 128 ---------
    out_f_pad = _round_up(out_f, 128)
    if out_f_pad != out_f:
        w = jnp.pad(w, ((0, 0), (0, out_f_pad - out_f)))
        b = jnp.pad(b, (0, out_f_pad - out_f))

    # --- row tiling: tile N, pad rows to a multiple of the tile ----------
    n8 = _round_up(n, 8)
    tm = min(int(block_rows), n8)
    tm = _round_up(tm, 8)
    n_pad = _round_up(n, tm)
    if n_pad != n:
        x = jnp.pad(x, ((0, n_pad - n), (0, 0)))

    x_c = x.astype(compute_dtype)
    w_c = w.astype(compute_dtype)
    b2d = b.reshape(1, out_f_pad).astype(jnp.float32)

    grid = (n_pad // tm,)
    itemsize = jnp.dtype(compute_dtype).itemsize

    kernel = functools.partial(_sine_layer_kernel, omega_0=float(omega_0))
    out = pl.pallas_call(
        kernel,
        out_shape=jax.ShapeDtypeStruct((n_pad, out_f_pad), jnp.float32),
        grid=grid,
        in_specs=[
            # x: one row-tile per grid step (double-buffered by Pallas).
            pl.BlockSpec((tm, in_f), lambda i: (i, 0)),
            # w, b: same block every step -> loaded once, resident in VMEM.
            pl.BlockSpec((in_f, out_f_pad), lambda i: (0, 0)),
            pl.BlockSpec((1, out_f_pad), lambda i: (0, 0)),
        ],
        out_specs=pl.BlockSpec((tm, out_f_pad), lambda i: (i, 0)),
        compiler_params=pltpu.CompilerParams(
            dimension_semantics=("parallel",)),
        cost_estimate=pl.CostEstimate(
            flops=2 * n_pad * in_f * out_f_pad,
            transcendentals=n_pad * out_f_pad,
            bytes_accessed=(n_pad * in_f * itemsize
                            + in_f * out_f_pad * itemsize
                            + 4 * out_f_pad
                            + 4 * n_pad * out_f_pad),
        ),
    )(x_c, w_c, b2d)

    return out[:n, :out_f]


def init_sine_layer_params(key, in_features, out_features, is_first=False,
                           omega_0=30.0):
    """Deterministic SIREN init (mirrors SineLayer.init_weights)."""
    kw, kb = jax.random.split(key)
    if is_first:
        bound = 1.0 / in_features
    else:
        bound = float(jnp.sqrt(6.0 / in_features)) / omega_0
    # Stored as (in_features, out_features) == PyTorch weight transposed.
    w = jax.random.uniform(kw, (in_features, out_features), jnp.float32,
                           minval=-bound, maxval=bound)
    # nn.Linear default bias init: U(-1/sqrt(in), 1/sqrt(in))
    b_bound = 1.0 / (in_features ** 0.5)
    b = jax.random.uniform(kb, (out_features,), jnp.float32,
                           minval=-b_bound, maxval=b_bound)
    return w, b


if __name__ == "__main__":
    key = jax.random.PRNGKey(0)
    k_x, k_p = jax.random.split(key)

    N, IN_F, OUT_F = 8, 16, 32
    OMEGA_0 = 30.0

    x = jax.random.uniform(k_x, (N, IN_F), jnp.float32, minval=-1.0, maxval=1.0)
    w, b = init_sine_layer_params(k_p, IN_F, OUT_F, is_first=True,
                                  omega_0=OMEGA_0)

    # Plain-JAX reference of the same math.
    ref = jnp.sin(OMEGA_0 * (x @ w + b))

    # f32 path (exact parity with reference).
    out = sine_layer(x, w, b, omega_0=OMEGA_0)
    jax.block_until_ready(out)
    assert out.shape == (N, OUT_F)
    assert jnp.allclose(out, ref, atol=1e-5, rtol=1e-5)

    # bf16 matmul-input path (f32 accumulate + f32 epilogue): sanity check
    # only, omega_0=30 amplifies bf16 rounding in the sin argument.
    out_bf16 = sine_layer(x, w, b, omega_0=OMEGA_0,
                          compute_dtype=jnp.bfloat16)
    jax.block_until_ready(out_bf16)
    assert out_bf16.shape == (N, OUT_F)
    assert jnp.allclose(out_bf16, ref, atol=0.25, rtol=0.25)

    print("KERNEL_OK")
</pallas_src>

<mosaic_0001>
module attributes {stable_mosaic.version = 11 : i64} {
  func.func @_sine_layer_kernel(%arg0: i32, %arg1: memref<8x16xf32, #tpu.memory_space<vmem>>, %arg2: memref<16x128xf32, #tpu.memory_space<vmem>>, %arg3: memref<1x128xf32, #tpu.memory_space<vmem>>, %arg4: memref<8x128xf32, #tpu.memory_space<vmem>>) attributes {dimension_semantics = [#tpu.dimension_semantics<parallel>], iteration_bounds = array<i64: 1>, scalar_prefetch = 0 : i64, scratch_operands = 0 : i64, tpu.core_type = #tpu.core_type<tc>, window_params = [{transform_indices = @transform_0, window_bounds = array<i64: 8, 16>}, {pipeline_mode = #tpu.pipeline_mode<synchronous>, transform_indices = @transform_1, window_bounds = array<i64: 16, 128>}, {pipeline_mode = #tpu.pipeline_mode<synchronous>, transform_indices = @transform_2, window_bounds = array<i64: 1, 128>}, {transform_indices = @transform_3, window_bounds = array<i64: 8, 128>}]} {
    %c0 = arith.constant 0 : index
    %c0_0 = arith.constant 0 : index
    %0 = vector.load %arg1[%c0, %c0_0] : memref<8x16xf32, #tpu.memory_space<vmem>>, vector<8x16xf32>
    %c0_1 = arith.constant 0 : index
    %c0_2 = arith.constant 0 : index
    %1 = vector.load %arg2[%c0_1, %c0_2] : memref<16x128xf32, #tpu.memory_space<vmem>>, vector<16x128xf32>
    %cst = arith.constant dense<0.000000e+00> : vector<8x128xf32>
    %2 = tpu.matmul %0, %1, %cst {dimension_numbers = #tpu.dot_dimension_numbers<[1], [0], [0], [1], [0, 0, 1, 1], [], []>} : vector<8x16xf32>, vector<16x128xf32>, vector<8x128xf32> -> vector<8x128xf32>
    %c0_3 = arith.constant 0 : index
    %c0_4 = arith.constant 0 : index
    %3 = vector.load %arg3[%c0_3, %c0_4] : memref<1x128xf32, #tpu.memory_space<vmem>>, vector<1x128xf32>
    %4 = vector.broadcast %3 : vector<1x128xf32> to vector<8x128xf32>
    %5 = arith.addf %2, %4 : vector<8x128xf32>
    %cst_5 = arith.constant 3.000000e+01 : f32
    %6 = vector.broadcast %cst_5 : f32 to vector<8x128xf32>
    %7 = arith.mulf %6, %5 : vector<8x128xf32>
    %8 = math.sin %7 : vector<8x128xf32>
    %c0_6 = arith.constant 0 : index
    %c0_7 = arith.constant 0 : index
    %9 = vector.load %arg4[%c0_6, %c0_7] : memref<8x128xf32, #tpu.memory_space<vmem>>, vector<8x128xf32>
    tpu.vector_store %arg4[%c0_6, %c0_7], %8 {strides = array<i32>} : memref<8x128xf32, #tpu.memory_space<vmem>>, vector<8x128xf32>,
    return
  }
  func.func @transform_0(%arg0: i32) -> (i32, i32) {
    %c0_i32 = arith.constant 0 : i32
    %c0_i32_0 = arith.constant 0 : i32
    return %arg0, %c0_i32 : i32, i32
  }
  func.func @transform_1(%arg0: i32) -> (i32, i32) {
    %c0_i32 = arith.constant 0 : i32
    %c0_i32_0 = arith.constant 0 : i32
    %c0_i32_1 = arith.constant 0 : i32
    return %c0_i32, %c0_i32_0 : i32, i32
  }
  func.func @transform_2(%arg0: i32) -> (i32, i32) {
    %c0_i32 = arith.constant 0 : i32
    %c0_i32_0 = arith.constant 0 : i32
    %c0_i32_1 = arith.constant 0 : i32
    return %c0_i32, %c0_i32_0 : i32, i32
  }
  func.func @transform_3(%arg0: i32) -> (i32, i32) {
    %c0_i32 = arith.constant 0 : i32
    %c0_i32_0 = arith.constant 0 : i32
    return %arg0, %c0_i32 : i32, i32
  }
}

</mosaic_0001>

<llo_original>
// kernel: tpu_custom_call.1
$region0: #{tpu_custom_call.1}
  #allocation0 [shape = 'u32[]', space=smem, size = 0x4, offset = 0x4, fixed_abs, tag = 'smem constant byte address 0x4 - core index']
  #allocation1 [shape = 'u32[144,128]{1,0:T(1,128)}', space=vmem, size = 0x12000, scoped, tag = 'internal scratch']
  %s0 = inlined_call_operand.hbm [shape: f32[8,16], index: 0, kind: input, shape index: {}]
  %s1 = inlined_call_operand.hbm [shape: f32[16,128], index: 1, kind: input, shape index: {}]
  %s2 = inlined_call_operand.vmem [shape: f32[1,128], index: 2, kind: input, shape index: {}]
  %s3 = inlined_call_operand.hbm [shape: f32[8,128], index: 3, kind: output, shape index: {}]
  %s4 = sld [smem:[#allocation0]]
  $region30: #{tpu_custom_call.1} parent=0
    _
  %s6 = ssub.s32 1, %s4
  %s7 = scalar_select 0, %s6, %s4
  $region1: #{tpu_custom_call.1} parent=0
    #allocation2 [shape = 'u8[4096]{0}', space=vmem, size = 0x1000, scoped, tag = 'input window, operand 0, single buffered']
    #allocation3 [shape = 's32[1]{0}', space=sflag, size = 0x4, scoped, tag = 'scoped memory for tpu_custom_call.1']
    #allocation4 [shape = 's32[1]{0}', space=sflag, size = 0x4, scoped, tag = 'scoped memory for tpu_custom_call.1']
    #allocation5 [shape = 'u8[8192]{0}', space=vmem, size = 0x2000, scoped, tag = 'input window, operand 1, single buffered']
    #allocation6 [shape = 's32[1]{0}', space=sflag, size = 0x4, scoped, tag = 'scoped memory for tpu_custom_call.1']
    #allocation7 [shape = 'u8[4096]{0}', space=vmem, size = 0x1000, scoped, tag = 'output window, operand 0, single buffered']
    %8 = vsyncpa [#allocation3], 0
    %9 = vsyncpa [#allocation6], 0
    %10 = vsyncpa [#allocation4], 0
    // Predicated region
    $region2: #{tpu_custom_call.1} parent=1 // pred_check
      _
    $region3: #{tpu_custom_call.1} parent=1 // pred_check_branch
      %12 = sbr.rel (0) target = $region5
    $region4: #{tpu_custom_call.1} parent=1 // pred_region
      %s14 = ssub.s32 128, 128
      %15 = vsyncadd [#allocation3], %s14
      %s17 = sshll.u32 [#allocation2], 4
      %s18 = int_to_ptr.vmem [resolvable:$true] %s17
      %20 = dma.hbm_to_vmem [thread:$0]  %s0, 128, %s18, [#allocation3]
    $region5: #{tpu_custom_call.1} parent=1 // pred_fallthru
      _
    // Predicated region
    $region6: #{tpu_custom_call.1} parent=1 // pred_check
      _
    $region7: #{tpu_custom_call.1} parent=1 // pred_check_branch
      %22 = sbr.rel (0) target = $region9
    $region8: #{tpu_custom_call.1} parent=1 // pred_region
      %s24 = ssub.s32 256, 256
      %25 = vsyncadd [#allocation6], %s24
      %s26 = sshll.u32 [#allocation5], 4
      %s27 = int_to_ptr.vmem [resolvable:$true] %s26
      %32 = dma.hbm_to_vmem [thread:$0]  %s1, 256, %s27, [#allocation6], 128, 128, 8
    $region9: #{tpu_custom_call.1} parent=1 // pred_fallthru
      _
    // Predicated region
    $region10: #{tpu_custom_call.1} parent=1 // pred_check
      _
    $region11: #{tpu_custom_call.1} parent=1 // pred_check_branch
      %34 = sbr.rel (0) target = $region13
    $region12: #{tpu_custom_call.1} parent=1 // pred_region
      _
    $region13: #{tpu_custom_call.1} parent=1 // pred_fallthru
      _
    // Predicated region
    $region14: #{tpu_custom_call.1} parent=1 // pred_check
      _
    $region15: #{tpu_custom_call.1} parent=1 // pred_check_branch
      %36 = sbr.rel (0) target = $region17
    $region16: #{tpu_custom_call.1} parent=1 // pred_region
      %37 = dma.done [#allocation3], 128
    $region17: #{tpu_custom_call.1} parent=1 // pred_fallthru
      _
    // Predicated region
    $region18: #{tpu_custom_call.1} parent=1 // pred_check
      _
    $region19: #{tpu_custom_call.1} parent=1 // pred_check_branch
      %39 = sbr.rel (0) target = $region21
    $region20: #{tpu_custom_call.1} parent=1 // pred_region
      %40 = dma.done [#allocation6], 256
    $region21: #{tpu_custom_call.1} parent=1 // pred_fallthru
      _
    %v41 = vld [vmem:[#allocation2] sm:$0xff]
    %v42 = vld [vmem:[#allocation5] sm:$0xff]
    %v43 = vld [vmem:[#allocation5 + $0x8] sm:$0xff]
    %v44 = vld [vmem:[%s2] sm:$0x1]
    %v46 = vlaneseq
    %v47 = vshrl.u32 %v46, 7
    %v48 = vsub.s32 0, %v47
    %v49 = vrot.slane %v44, %v48
    %vm51 = vcmask 130048
    %v53 = vsel %vm51, %v41, 0
    %55 = vmatprep.subr.mxu0 0.0
    %56 = vmatpush1.msra.mxu0 %v42
    %57 = vmatprep.subr.mxu0 0.0
    %58 = vmatpush1.msra.mxu0 %v43
    %59 = vmatprep.subr.mxu0 0.0
    %60 = vmatpush1.msra.mxu0 0.0
    %61 = vmatprep.subr.mxu0 0.0
    %62 = vmatpush1.msra.mxu0 0.0
    %63 = vmatprep.subr.mxu0 0.0
    %64 = vmatpush1.msra.mxu0 0.0
    %65 = vmatprep.subr.mxu0 0.0
    %66 = vmatpush1.msra.mxu0 0.0
    %67 = vmatprep.subr.mxu0 0.0
    %68 = vmatpush1.msra.mxu0 0.0
    %69 = vmatprep.subr.mxu0 0.0
    %70 = vmatpush1.msra.mxu0 0.0
    %71 = vmatprep.subr.mxu0 0.0
    %72 = vmatpush1.msra.mxu0 0.0
    %73 = vmatprep.subr.mxu0 0.0
    %74 = vmatpush1.msra.mxu0 0.0
    %75 = vmatprep.subr.mxu0 0.0
    %76 = vmatpush1.msra.mxu0 0.0
    %77 = vmatprep.subr.mxu0 0.0
    %78 = vmatpush1.msra.mxu0 0.0
    %79 = vmatprep.subr.mxu0 0.0
    %80 = vmatpush1.msra.mxu0 0.0
    %81 = vmatprep.subr.mxu0 0.0
    %82 = vmatpush1.msra.mxu0 0.0
    %83 = vmatprep.subr.mxu0 0.0
    %84 = vmatpush1.msra.mxu0 0.0
    %85 = vmatprep.subr.mxu0 0.0
    %86 = vmatpush1.msra.mxu0 0.0
    %87 = vmatprep.subr.mxu0 0.0
    %88 = vmatpush1.msra.mxu0 0.0
    %89 = vmatprep.subr.mxu0 0.0
    %90 = vmatpush1.msra.mxu0 0.0
    %91 = vmatprep.subr.mxu0 0.0
    %92 = vmatpush1.msra.mxu0 0.0
    %93 = vmatprep.subr.mxu0 0.0
    %94 = vmatpush1.msra.mxu0 0.0
    %95 = vmatprep.subr.mxu0 0.0
    %96 = vmatpush1.msra.mxu0 0.0
    %97 = vmatprep.subr.mxu0 0.0
    %98 = vmatpush1.msra.mxu0 0.0
    %99 = vmatprep.subr.mxu0 0.0
    %100 = vmatpush1.msra.mxu0 0.0
    %101 = vmatprep.subr.mxu0 0.0
    %102 = vmatpush1.msra.mxu0 0.0
    %103 = vmatprep.subr.mxu0 0.0
    %104 = vmatpush1.msra.mxu0 0.0
    %105 = vmatprep.subr.mxu0 0.0
    %106 = vmatpush1.msra.mxu0 0.0
    %107 = vmatprep.subr.mxu0 0.0
    %108 = vmatpush1.msra.mxu0 0.0
    %109 = vmatprep.subr.mxu0 0.0
    %110 = vmatpush1.msra.mxu0 0.0
    %111 = vmatprep.subr.mxu0 0.0
    %112 = vmatpush1.msra.mxu0 0.0
    %113 = vmatprep.subr.mxu0 0.0
    %114 = vmatpush1.msra.mxu0 0.0
    %115 = vmatprep.subr.mxu0 0.0
    %116 = vmatpush1.msra.mxu0 0.0
    %117 = vmatprep.subr.mxu0 0.0
    %118 = vmatpush1.msra.mxu0 0.0
    %119 = vmatprep.mubr.f32.mxu0 0.0
    %120 = vmatmul.mubr.f32.gmra.mrb[0].mxu0 %v53
    %v121 = vpop.f32.mrb[0].mxu0
    %v122 = vadd.f32 %v49, %v121
    %v123 = vpop.f32.mrb[0].mxu0
    %124 = vdwg.mxu0
    %v125 = vmul.f32 %v122, 30.0
    %v126 = vand.u32 2147483647, %v125
    %vm127 = vcmp.le.f32.partialorder %v126, 0.7853982
    %vm128 = vcmp.lt.s32.totalorder %v125, 0
    %v129 = vand.u32 %v125, 2139095040
    %v130 = vshrl.u32 %v129, 23
    %v131 = vsub.s32 %v130, 127
    %v132 = vand.u32 2147483647, %v125
    %v133 = vand.u32 %v132, 8388607
    %v134 = vor.u32 %v133, 8388608
    %v135 = vsub.s32 0, %v134
    %v136 = vadd.s32 %v131, 1
    %vm137 = vcmp.gt.s32.totalorder %v136, 0
    %v138 = vsel %vm137, %v136, 0
    %v139 = vshrl.u32 %v138, 5
    %v140 = vand.u32 %v138, 31
    %v141 = vsub.s32 32, %v140
    %v142 = vshrl.u32 683565275, %v141
    %v143 = vshll.u32 683565275, %v140
    %v144 = vshrl.u32 2475754826, %v141
    %v145 = vor.u32 %v143, %v144
    %v146 = vshll.u32 2475754826, %v140
    %v147 = vshrl.u32 2131351028, %v141
    %v148 = vor.u32 %v146, %v147
    %v149 = vshll.u32 2131351028, %v140
    %v150 = vshrl.u32 2102212464, %v141
    %v151 = vor.u32 %v149, %v150
    %v152 = vshll.u32 2102212464, %v140
    %v153 = vshrl.u32 920167782, %v141
    %v154 = vor.u32 %v152, %v153
    %v155 = vshll.u32 920167782, %v140
    %v156 = vshrl.u32 1326507024, %v141
    %v157 = vor.u32 %v155, %v156
    %vm158 = vcmp.lt.s32.totalorder %v139, 1
    %vm159 = vcmp.lt.s32.totalorder %v139, 2
    %vm160 = vcmp.lt.s32.totalorder %v139, 3
    %vm161 = vcmp.lt.s32.totalorder %v139, 4
    %v162 = vsel %vm158, %v142, %v145
    %v163 = vsel %vm161, %v151, 2102212464
    %v164 = vsel %vm160, %v148, %v163
    %v165 = vsel %vm159, %v162, %v164
    %v166 = vsel %vm158, %v145, %v148
    %v167 = vsel %vm161, %v154, 920167782
    %v168 = vsel %vm160, %v151, %v167
    %v169 = vsel %vm159, %v166, %v168
    %v170 = vsel %vm158, %v148, %v151
    %v171 = vsel %vm161, %v157, 1326507024
    %v172 = vsel %vm160, %v154, %v171
    %v173 = vsel %vm159, %v170, %v172
    %v174 = vshll.u32 %v134, 8
    %v175 = vmul.u32.u64.compose %v174, %v173
    %v176 = vextract.low.u32 %v175
    %v177 = vextract.high.u32 %v175
    %v178 = vmul.u32.u64.compose %v174, %v169
    %v179 = vextract.low.u32 %v178
    %v180 = vextract.high.u32 %v178
    %v181 = vmul.u32 %v174, %v165
    %v182 = vadd.s32 %v177, %v179
    %vm183 = vc.u32 %v177, %v179
    %v184 = vadd.s32 %v180, 1
    %v185 = vsel %vm183, %v184, %v180
    %v186 = vadd.s32 %v181, %v185
    %v187 = vadd.s32 %v186, 536870912
    %v188 = vshrl.u32 %v187, 30
    %v189 = vshll.u32 %v188, 30
    %v190 = vsub.s32 %v186, %v189
    %vm191 = vcmp.lt.s32.totalorder %v190, 0
    %v192 = vsub.s32 0, %v190
    %v193 = vsel %vm191, %v192, %v190
    %v194 = vclz %v193
    %v195 = vsub.s32 %v194, 2
    %vm196 = vcmp.gt.s32.totalorder 0, %v195
    %v197 = vsel %vm196, 0, %v195
    %v198 = vsub.s32 32, %v197
    %v199 = vshll.u32 %v190, %v197
    %v200 = vshrl.u32 %v182, %v198
    %v201 = vor.u32 %v199, %v200
    %v202 = vsub.s32 4294967266, %v197
    %v203 = vadd.s32 %v202, 127
    %v204 = vshll.u32 %v203, 23
    %v205 = vor.u32 4788187, %v204
    %v206 = vand.u32 2147483647, %v205
    %v208 = vcvt.s32.f32 %v201
    %v209 = vmul.f32 %v208, %v206
    %v210 = vxor.u32 %v209, 2147483648
    %v211 = vsel %vm128, %v210, %v209
    %v212 = vsub.s32 4, %v188
    %v213 = vsel %vm128, %v212, %v188
    %v214 = vsel %vm127, %v125, %v211
    %v215 = vsel %vm127, 0, %v213
    %v216 = vcosq.f32.pop %v214
    %v217 = vsinq.f32.pop %v214
    %vm218 = vweird.f32 %v125
    %v219 = vadd.s32 %v215, 3
    %v220 = vand.u32 %v219, 3
    %vm221 = vcmp.lt.s32.totalorder %v220, 2
    %vm222 = vcmp.eq.s32.totalorder %v220, 0
    %v223 = vxor.u32 %v217, 2147483648
    %v224 = vsel %vm222, %v216, %v223
    %vm225 = vcmp.eq.s32.totalorder %v220, 2
    %v226 = vxor.u32 %v216, 2147483648
    %v227 = vsel %vm225, %v226, %v217
    %v228 = vsel %vm221, %v224, %v227
    %v229 = vsel %vm218, nan, %v228
    %230 = vst [vmem:[#allocation7] sm:$0xff] %v229
    // Predicated region
    $region22: #{tpu_custom_call.1} parent=1 // pred_check
      _
    $region23: #{tpu_custom_call.1} parent=1 // pred_check_branch
      %232 = sbr.rel (0) target = $region25
    $region24: #{tpu_custom_call.1} parent=1 // pred_region
      %s234 = ssub.s32 128, 128
      %235 = vsyncadd [#allocation4], %s234
      %s237 = sshll.u32 [#allocation7], 4
      %s238 = int_to_ptr.vmem [resolvable:$true] %s237
      %240 = dma.vmem_to_hbm [thread:$0]  %s238, 128, %s3, [#allocation4]
    $region25: #{tpu_custom_call.1} parent=1 // pred_fallthru
      _
    // Predicated region
    $region26: #{tpu_custom_call.1} parent=1 // pred_check
      _
    $region27: #{tpu_custom_call.1} parent=1 // pred_check_branch
      %242 = sbr.rel (0) target = $region29
    $region28: #{tpu_custom_call.1} parent=1 // pred_region
      %243 = dma.done [#allocation4], 128
    $region29: #{tpu_custom_call.1} parent=1 // pred_fallthru
      _
    %244 = vsyncpa [#allocation3], 1
    %245 = vsyncpa [#allocation6], 1
    %246 = vsyncpa [#allocation4], 1

</llo_original>
